<compile_context>
chip_gen: v5e
topology: v5e:2x2
jax: 0.10.0
libtpu: 0.0.40
codegen_flags: <defaults>
</compile_context>

<pallas_src>
import functools
import math

import jax
import jax.numpy as jnp
from jax import lax
from jax.experimental import pallas as pl
from jax.experimental.pallas import tpu as pltpu


def _round_up(x, n):
    return ((x + n - 1) // n) * n


def _vmem_cap_bytes():
    """Physical VMEM per TensorCore; conservative fallback = v7x (64 MiB)."""
    try:
        cap = int(getattr(pltpu.get_tpu_info(), "vmem_capacity_bytes", 0))
        if cap > 0:
            return cap
    except Exception:
        pass
    return 64 << 20


def _cosface_kernel(flags_ref, x_ref, wT_ref, row_scale_ref, inv_wn_ref,
                    label_ref, o_ref, *, s_times_m, block_c):
    """One (B_pad, TC) output tile; grid is 1-D over class tiles.

    flags_ref:     (n_class_tiles,) int32 SMEM  -> 1 if any label hits tile j
    x_ref:         (B_pad, D)  compute dtype    (resident)
    wT_ref:        (D, TC)     compute dtype    (streamed once)
    row_scale_ref: (B_pad, 1)  f32  -> s / ||x_row||       (resident)
    inv_wn_ref:    (1, TC)     f32  -> 1 / ||w_row||        (streamed)
    label_ref:     (B_pad, 1)  int32                        (resident)
    o_ref:         (B_pad, TC) out dtype
    """
    j = pl.program_id(0)

    # MXU: (B, D) @ (D, TC) with f32 accumulation (no W transpose needed).
    dots = jnp.dot(x_ref[...], wT_ref[...], preferred_element_type=jnp.float32)

    # s * cosine via one per-row and one per-column scale.
    scaled = dots * row_scale_ref[...] * inv_wn_ref[...]

    # CosFace margin only on class tiles that actually contain a true label.
    @pl.when(flags_ref[j] != 0)
    def _():
        class_ids = j * block_c + lax.broadcasted_iota(jnp.int32, scaled.shape, 1)
        o_ref[...] = jnp.where(class_ids == label_ref[...],
                               scaled - s_times_m, scaled).astype(o_ref.dtype)

    @pl.when(flags_ref[j] == 0)
    def _():
        o_ref[...] = scaled.astype(o_ref.dtype)


def prepare_cosface_weight(weight, *, block_c=512, compute_dtype=jnp.bfloat16):
    """One-time (per parameter update) weight prep, hoisted out of the forward.

    Returns a dict with the pre-transposed, padded, cast weight (D, C_pad),
    its padded inverse row norms (1, C_pad), and the tiling metadata.
    """
    C, D = weight.shape
    block_c = max(128, _round_up(int(block_c), 128))
    tc = min(block_c, _round_up(C, 128))
    C_pad = _round_up(C, tc)

    w32 = weight.astype(jnp.float32)
    inv_wn = 1.0 / jnp.maximum(
        jnp.sqrt(jnp.sum(w32 * w32, axis=1)), 1e-12)              # (C,)
    wT = jnp.pad(w32.T, ((0, 0), (0, C_pad - C))).astype(compute_dtype)  # (D, C_pad)
    inv_wn_p = jnp.pad(inv_wn.reshape(1, C), ((0, 0), (0, C_pad - C)),
                       constant_values=1.0)                        # (1, C_pad)
    return dict(wT=wT, inv_wn=inv_wn_p, C=C, D=D, tc=tc, C_pad=C_pad)


def cosface_forward(x, prep, label, *, s=64.0, m=0.35, out_dtype=jnp.float32):
    """x: (B, D) float, prep: from prepare_cosface_weight, label: (B,) int.

    Returns (B, C) logits in `out_dtype` (f32 default = PyTorch semantics;
    bf16 halves the dominant output HBM stream).
    """
    B, D = x.shape
    wT, inv_wn_p = prep["wT"], prep["inv_wn"]
    tc, C_pad, C = prep["tc"], prep["C_pad"], prep["C"]
    assert D == prep["D"]
    compute_dtype = wT.dtype

    # --- Prologue (f32 accumulation, x only; W prep is hoisted). -------------
    B_pad = _round_up(B, 8)
    sq = jnp.sum(jnp.square(x.astype(jnp.float32)), axis=1, keepdims=True)
    row_scale = float(s) / jnp.maximum(jnp.sqrt(sq), 1e-12)          # s/||x||, (B,1)

    x_p = jnp.pad(x, ((0, B_pad - B), (0, 0))).astype(compute_dtype)
    rs_p = jnp.pad(row_scale, ((0, B_pad - B), (0, 0)), constant_values=0.0)
    label_i = label.astype(jnp.int32)
    label_p = jnp.pad(label_i.reshape(B, 1), ((0, B_pad - B), (0, 0)),
                      constant_values=-1)                            # never matches

    # Per-class-tile "has a true label" flags (scalar-prefetched into SMEM).
    num_ct = C_pad // tc
    flags = jnp.zeros((num_ct,), jnp.int32).at[label_i // tc].set(1)

    # --- VMEM budget: resident x/labels + double-buffered streamed tiles. ----
    cd = jnp.dtype(compute_dtype).itemsize
    od = jnp.dtype(out_dtype).itemsize
    resident_bytes = B_pad * D * cd + 2 * B_pad * 4
    streamed_bytes = D * tc * cd + tc * 4 + B_pad * tc * od
    needed = 2 * (resident_bytes + streamed_bytes) + (8 << 20)
    cap = _vmem_cap_bytes()                       # 64 MiB v7x, 128 MiB v5e/v6e
    ceiling = max(32 << 20, cap - (24 << 20))     # leave compiler headroom
    vmem_bytes = int(min(max(needed, 32 << 20), ceiling))

    kernel = functools.partial(_cosface_kernel,
                               s_times_m=float(s) * float(m), block_c=tc)
    out = pl.pallas_call(
        kernel,
        out_shape=jax.ShapeDtypeStruct((B_pad, C_pad), out_dtype),
        grid_spec=pltpu.PrefetchScalarGridSpec(
            num_scalar_prefetch=1,
            grid=(num_ct,),
            in_specs=[
                pl.BlockSpec((B_pad, D), lambda j, flags: (0, 0)),   # x (resident)
                pl.BlockSpec((D, tc),    lambda j, flags: (0, j)),   # W^T (once)
                pl.BlockSpec((B_pad, 1), lambda j, flags: (0, 0)),   # s/||x|| (resident)
                pl.BlockSpec((1, tc),    lambda j, flags: (0, j)),   # 1/||w||
                pl.BlockSpec((B_pad, 1), lambda j, flags: (0, 0)),   # labels (resident)
            ],
            out_specs=pl.BlockSpec((B_pad, tc), lambda j, flags: (0, j)),
        ),
        compiler_params=pltpu.CompilerParams(
            dimension_semantics=("parallel",),   # v7x: classes split across TCs
            vmem_limit_bytes=vmem_bytes,
        ),
    )(flags, x_p, wT, rs_p, inv_wn_p, label_p)

    return out[:B, :C]


def _xavier_uniform(key, out_features, in_features):
    # nn.init.xavier_uniform_ on a (out, in) weight: U(-a, a), a = sqrt(6/(in+out))
    bound = math.sqrt(6.0 / (in_features + out_features))
    return jax.random.uniform(
        key, (out_features, in_features), dtype=jnp.float32,
        minval=-bound, maxval=bound)


if __name__ == "__main__":
    in_features = 64
    out_features = 512   # multiple of 128 -> lane-dense class tiles
    batch = 32
    s_scale = 64.0
    margin = 0.35

    key = jax.random.PRNGKey(0)
    kx, kw, kl = jax.random.split(key, 3)

    x = jax.random.normal(kx, (batch, in_features), dtype=jnp.float32)
    weight = _xavier_uniform(kw, out_features, in_features)
    # Labels restricted to the first half of the classes so some class tiles
    # take the no-margin fast path (exercises both pl.when branches).
    label = jax.random.randint(kl, (batch,), 0, out_features // 2, dtype=jnp.int32)

    # Small class tile so the demo exercises a real multi-step grid and the
    # class-iota offset; production sizes would use block_c=512+ (256-aligned
    # tiles keep v6e/v7x's 256x256 MXU full).
    prep = prepare_cosface_weight(weight, block_c=128)
    out = cosface_forward(x, prep, label, s=s_scale, m=margin)
    out = jax.block_until_ready(out)

    # Reference 1: same math as the kernel (bf16 MXU operands, f32 accum/scale).
    def ref_bf16(x, w, lbl):
        inv_xn = 1.0 / jnp.maximum(jnp.linalg.norm(x, axis=1, keepdims=True), 1e-12)
        inv_wn = 1.0 / jnp.maximum(jnp.linalg.norm(w, axis=1, keepdims=True), 1e-12)
        cos = jnp.dot(x.astype(jnp.bfloat16), w.astype(jnp.bfloat16).T,
                      preferred_element_type=jnp.float32) * inv_xn * inv_wn.T
        oh = jax.nn.one_hot(lbl, w.shape[0], dtype=jnp.float32)
        return s_scale * (oh * (cos - margin) + (1.0 - oh) * cos)

    # Reference 2: full-f32 PyTorch semantics (loose tol: bf16 matmul operands,
    # s=64 amplifies rounding; pass compute_dtype=jnp.float32 to prep for an
    # exact-parity path at ~3x MXU cost).
    def ref_f32(x, w, lbl):
        xn = x / jnp.maximum(jnp.linalg.norm(x, axis=1, keepdims=True), 1e-12)
        wn = w / jnp.maximum(jnp.linalg.norm(w, axis=1, keepdims=True), 1e-12)
        cos = xn @ wn.T
        oh = jax.nn.one_hot(lbl, w.shape[0], dtype=jnp.float32)
        return s_scale * (oh * (cos - margin) + (1.0 - oh) * cos)

    assert out.shape == (batch, out_features)
    assert jnp.allclose(out, ref_bf16(x, weight, label), atol=1e-2, rtol=1e-2)
    assert jnp.allclose(out, ref_f32(x, weight, label), atol=0.75)

    print("KERNEL_OK")
</pallas_src>

<mosaic_0001>
module attributes {stable_mosaic.version = 11 : i64} {
  func.func @_cosface_kernel(%arg0: i32, %arg1: memref<4xi32, #tpu.memory_space<smem>>, %arg2: memref<32x64xbf16, #tpu.memory_space<vmem>>, %arg3: memref<64x128xbf16, #tpu.memory_space<vmem>>, %arg4: memref<32x1xf32, #tpu.memory_space<vmem>>, %arg5: memref<1x128xf32, #tpu.memory_space<vmem>>, %arg6: memref<32x1xi32, #tpu.memory_space<vmem>>, %arg7: memref<32x128xf32, #tpu.memory_space<vmem>>) attributes {dimension_semantics = [#tpu.dimension_semantics<parallel>], iteration_bounds = array<i64: 4>, scalar_prefetch = 1 : i64, scratch_operands = 0 : i64, tpu.core_type = #tpu.core_type<tc>, window_params = [{pipeline_mode = #tpu.pipeline_mode<synchronous>, transform_indices = @transform_0, window_bounds = array<i64: 32, 64>}, {transform_indices = @transform_1, window_bounds = array<i64: 64, 128>}, {pipeline_mode = #tpu.pipeline_mode<synchronous>, transform_indices = @transform_2, window_bounds = array<i64: 32, 1>}, {transform_indices = @transform_3, window_bounds = array<i64: 1, 128>}, {pipeline_mode = #tpu.pipeline_mode<synchronous>, transform_indices = @transform_4, window_bounds = array<i64: 32, 1>}, {transform_indices = @transform_5, window_bounds = array<i64: 32, 128>}]} {
    %c0 = arith.constant 0 : index
    %c0_0 = arith.constant 0 : index
    %0 = vector.load %arg2[%c0, %c0_0] : memref<32x64xbf16, #tpu.memory_space<vmem>>, vector<32x64xbf16>
    %c0_1 = arith.constant 0 : index
    %c0_2 = arith.constant 0 : index
    %1 = vector.load %arg3[%c0_1, %c0_2] : memref<64x128xbf16, #tpu.memory_space<vmem>>, vector<64x128xbf16>
    %cst = arith.constant dense<0.000000e+00> : vector<32x128xf32>
    %2 = tpu.matmul %0, %1, %cst {dimension_numbers = #tpu.dot_dimension_numbers<[1], [0], [0], [1], [0, 0, 1, 1], [], []>} : vector<32x64xbf16>, vector<64x128xbf16>, vector<32x128xf32> -> vector<32x128xf32>
    %c0_3 = arith.constant 0 : index
    %c0_4 = arith.constant 0 : index
    %3 = vector.load %arg4[%c0_3, %c0_4] : memref<32x1xf32, #tpu.memory_space<vmem>>, vector<32x1xf32>
    %4 = vector.broadcast %3 : vector<32x1xf32> to vector<32x128xf32>
    %5 = arith.mulf %2, %4 : vector<32x128xf32>
    %c0_5 = arith.constant 0 : index
    %c0_6 = arith.constant 0 : index
    %6 = vector.load %arg5[%c0_5, %c0_6] : memref<1x128xf32, #tpu.memory_space<vmem>>, vector<1x128xf32>
    %7 = vector.broadcast %6 : vector<1x128xf32> to vector<32x128xf32>
    %8 = arith.mulf %5, %7 : vector<32x128xf32>
    %9 = arith.index_cast %arg0 : i32 to index
    %10 = memref.load %arg1[%9] : memref<4xi32, #tpu.memory_space<smem>>
    %c0_i32 = arith.constant 0 : i32
    %11 = arith.cmpi ne, %10, %c0_i32 : i32
    %12 = arith.extui %11 : i1 to i32
    %c0_i32_7 = arith.constant 0 : i32
    %13 = arith.cmpi ne, %12, %c0_i32_7 : i32
    scf.if %13 {
      %c128_i32 = arith.constant 128 : i32
      %19 = arith.muli %arg0, %c128_i32 : i32
      %20 = tpu.iota {dimensions = array<i32: 1>} : vector<32x128xi32>
      %21 = vector.broadcast %19 : i32 to vector<32x128xi32>
      %22 = arith.addi %21, %20 : vector<32x128xi32>
      %c0_10 = arith.constant 0 : index
      %c0_11 = arith.constant 0 : index
      %23 = vector.load %arg6[%c0_10, %c0_11] : memref<32x1xi32, #tpu.memory_space<vmem>>, vector<32x1xi32>
      %24 = vector.broadcast %23 : vector<32x1xi32> to vector<32x128xi32>
      %25 = arith.cmpi eq, %22, %24 : vector<32x128xi32>
      %cst_12 = arith.constant 2.240000e+01 : f32
      %26 = vector.broadcast %cst_12 : f32 to vector<32x128xf32>
      %27 = arith.subf %8, %26 : vector<32x128xf32>
      %28 = arith.select %25, %27, %8 : vector<32x128xi1>, vector<32x128xf32>
      %c0_13 = arith.constant 0 : index
      %c0_14 = arith.constant 0 : index
      %29 = vector.load %arg7[%c0_13, %c0_14] : memref<32x128xf32, #tpu.memory_space<vmem>>, vector<32x128xf32>
      tpu.vector_store %arg7[%c0_13, %c0_14], %28 {strides = array<i32>} : memref<32x128xf32, #tpu.memory_space<vmem>>, vector<32x128xf32>,
    } else {
    }
    %14 = arith.index_cast %arg0 : i32 to index
    %15 = memref.load %arg1[%14] : memref<4xi32, #tpu.memory_space<smem>>
    %c0_i32_8 = arith.constant 0 : i32
    %16 = arith.cmpi eq, %15, %c0_i32_8 : i32
    %17 = arith.extui %16 : i1 to i32
    %c0_i32_9 = arith.constant 0 : i32
    %18 = arith.cmpi ne, %17, %c0_i32_9 : i32
    scf.if %18 {
      %c0_10 = arith.constant 0 : index
      %c0_11 = arith.constant 0 : index
      %19 = vector.load %arg7[%c0_10, %c0_11] : memref<32x128xf32, #tpu.memory_space<vmem>>, vector<32x128xf32>
      tpu.vector_store %arg7[%c0_10, %c0_11], %8 {strides = array<i32>} : memref<32x128xf32, #tpu.memory_space<vmem>>, vector<32x128xf32>,
    } else {
    }
    return
  }
  func.func @transform_0(%arg0: i32, %arg1: memref<4xi32, #tpu.memory_space<smem>>) -> (i32, i32) {
    %c0_i32 = arith.constant 0 : i32
    %c0_i32_0 = arith.constant 0 : i32
    %c0_i32_1 = arith.constant 0 : i32
    return %c0_i32, %c0_i32_0 : i32, i32
  }
  func.func @transform_1(%arg0: i32, %arg1: memref<4xi32, #tpu.memory_space<smem>>) -> (i32, i32) {
    %c0_i32 = arith.constant 0 : i32
    %c0_i32_0 = arith.constant 0 : i32
    return %c0_i32, %arg0 : i32, i32
  }
  func.func @transform_2(%arg0: i32, %arg1: memref<4xi32, #tpu.memory_space<smem>>) -> (i32, i32) {
    %c0_i32 = arith.constant 0 : i32
    %c0_i32_0 = arith.constant 0 : i32
    %c0_i32_1 = arith.constant 0 : i32
    return %c0_i32, %c0_i32_0 : i32, i32
  }
  func.func @transform_3(%arg0: i32, %arg1: memref<4xi32, #tpu.memory_space<smem>>) -> (i32, i32) {
    %c0_i32 = arith.constant 0 : i32
    %c0_i32_0 = arith.constant 0 : i32
    return %c0_i32, %arg0 : i32, i32
  }
  func.func @transform_4(%arg0: i32, %arg1: memref<4xi32, #tpu.memory_space<smem>>) -> (i32, i32) {
    %c0_i32 = arith.constant 0 : i32
    %c0_i32_0 = arith.constant 0 : i32
    %c0_i32_1 = arith.constant 0 : i32
    return %c0_i32, %c0_i32_0 : i32, i32
  }
  func.func @transform_5(%arg0: i32, %arg1: memref<4xi32, #tpu.memory_space<smem>>) -> (i32, i32) {
    %c0_i32 = arith.constant 0 : i32
    %c0_i32_0 = arith.constant 0 : i32
    return %c0_i32, %arg0 : i32, i32
  }
}

</mosaic_0001>

<llo_original>
// kernel: tpu_custom_call.1
$region0: #{tpu_custom_call.1}
  #allocation0 [shape = 'u32[]', space=smem, size = 0x4, offset = 0x4, fixed_abs, tag = 'smem constant byte address 0x4 - core index']
  #allocation1 [shape = 'u32[72,128]{1,0:T(1,128)}', space=vmem, size = 0x9000, scoped, tag = 'internal scratch']
  #allocation2 [shape = 's32[1]{0}', space=sflag, size = 0x4, scoped, tag = 'scoped memory for tpu_custom_call.1']
  #allocation3 [shape = 'u8[512]{0}', space=smem, size = 0x200, scoped, tag = 'prefetched SMEM operand 0']
  %s0 = inlined_call_operand.vmem [shape: s32[4], index: 0, kind: input, shape index: {}]
  %s1 = inlined_call_operand.vmem [shape: bf16[32,64], index: 1, kind: input, shape index: {}]
  %s2 = inlined_call_operand.hbm [shape: bf16[64,512], index: 2, kind: input, shape index: {}]
  %s3 = inlined_call_operand.vmem [shape: f32[32,1], index: 3, kind: input, shape index: {}]
  %s4 = inlined_call_operand.vmem [shape: f32[1,512], index: 4, kind: input, shape index: {}]
  %s5 = inlined_call_operand.vmem [shape: s32[32,1], index: 5, kind: input, shape index: {}]
  %s6 = inlined_call_operand.hbm [shape: f32[32,512], index: 6, kind: output, shape index: {}]
  %s7 = sld [smem:[#allocation0]]
  $region65: #{tpu_custom_call.1} parent=0
    _
  %s9 = ssub.s32 1, %s7
  %s10 = scalar_select 0, %s9, %s7
  %s12 = sshll.u32 %s0, 4
  %s13 = int_to_ptr.vmem [resolvable:$true] %s12
  %15 = dma.vmem_to_smem %s13, 16, [#allocation3], [#allocation2]
  %17 = dma.done [#allocation2], 16
  %18 = sfence
  $region1: #{tpu_custom_call.1} parent=0
    #allocation4 [shape = 'u8[32768]{0}', space=vmem, size = 0x8000, scoped, tag = 'input window, operand 2']
    #allocation5 [shape = 's32[2]{0}', space=sflag, size = 0x8, scoped, tag = 'scoped memory for tpu_custom_call.1']
    #allocation6 [shape = 's32[2]{0}', space=sflag, size = 0x8, scoped, tag = 'scoped memory for tpu_custom_call.1']
    #allocation7 [shape = 'u8[32768]{0}', space=vmem, size = 0x8000, scoped, tag = 'output window, operand 0']
    %19 = vsyncpa [#allocation5], 0
    %s20 = scalar_lea.sflag [#allocation5], 1
    %21 = vsyncpa %s20, 0
    %22 = vsyncpa [#allocation6], 0
    %s23 = scalar_lea.sflag [#allocation6], 1
    %24 = vsyncpa %s23, 0
    loop: start=0, step=1, limit=6
    $region2: #{tpu_custom_call.1} parent=1 // loop_pre_header
      _
    $region3: #{tpu_custom_call.1} parent=1 // loop_header
      %s26 = sphi 0, %s30
      %p27 = scmp.ge.s32.totalorder %s26, 6
      %s34 = sphi 0, %s34
      %s36 = sphi 0, %s34
      %s37 = sphi 0, %s36
      %s51 = sphi 0, %s37
      %s57 = sphi 0, %s59
      %s60 = sphi 0, %s57
      %s61 = sphi 0, %s60
      %s77 = sphi 0, %s61
      %s81 = sphi 0, %s81
      %s83 = sphi 0, %s81
      %s84 = sphi 0, %s83
      %s98 = sphi 0, %s84
      %s104 = sphi 0, %s106
      %s107 = sphi 0, %s104
      %s108 = sphi 0, %s107
      %s124 = sphi 0, %s108
      %s128 = sphi 0, %s128
      %s130 = sphi 0, %s128
      %s131 = sphi 0, %s130
      %s145 = sphi 0, %s131
      %s151 = sphi 0, %s153
      %s154 = sphi 0, %s151
      %s155 = sphi 0, %s154
      %s171 = sphi 0, %s155
    $region4: #{tpu_custom_call.1} parent=1 // loop_header_branch
      %29 = sbr.rel (%p27) target = $region8
    $region5: #{tpu_custom_call.1} parent=1 // loop_body
      %s31 = ssub.s32 %s26, 1
      %s32 = ssub.s32 %s26, 2
      %s33 = sadd.s32 %s26, 1
      %s35 = sadd.s32 %s34, 1
      %p38 = scmp.eq.s32.totalorder %s26, 3
      %p39 = scmp.ne.s32.totalorder %s34, %s36
      %p40 = scmp.eq.s32.totalorder %s26, 0
      %p41 = por %p39, %p40
      %p42 = scmp.ne.s32.totalorder %s34, %s36
      %p43 = scmp.eq.s32.totalorder %s31, 3
      %p44 = por %p42, %p43
      %p45 = scmp.ne.s32.totalorder %s36, %s37
      %p46 = scmp.eq.s32.totalorder %s31, 0
      %p47 = por %p45, %p46
      %p48 = scmp.ne.s32.totalorder %s36, %s37
      %p49 = scmp.eq.s32.totalorder %s32, 3
      %p50 = por %p48, %p49
      %p52 = scmp.ne.s32.totalorder %s37, %s51
      %p53 = scmp.eq.s32.totalorder %s32, 0
      %p54 = por %p52, %p53
      %s55 = ssub.s32 %s26, %s33
      %p56 = scmp.eq.s32.totalorder %s55, 0
      %s58 = sadd.s32 %s57, 1
      %s59 = scalar_select %p56, %s57, %s58
      %p62 = pneg %p56
      %p63 = scmp.eq.s32.totalorder %s26, 3
      %p64 = por %p62, %p63
      %p65 = scmp.ne.s32.totalorder %s57, %s60
      %p66 = scmp.eq.s32.totalorder %s26, 0
      %p67 = por %p65, %p66
      %p68 = scmp.ne.s32.totalorder %s57, %s60
      %p69 = scmp.eq.s32.totalorder %s31, 3
      %p70 = por %p68, %p69
      %p71 = scmp.ne.s32.totalorder %s60, %s61
      %p72 = scmp.eq.s32.totalorder %s31, 0
      %p73 = por %p71, %p72
      %p74 = scmp.ne.s32.totalorder %s60, %s61
      %p75 = scmp.eq.s32.totalorder %s32, 3
      %p76 = por %p74, %p75
      %p78 = scmp.ne.s32.totalorder %s61, %s77
      %p79 = scmp.eq.s32.totalorder %s32, 0
      %p80 = por %p78, %p79
      %s82 = sadd.s32 %s81, 1
      %p85 = scmp.eq.s32.totalorder %s26, 3
      %p86 = scmp.ne.s32.totalorder %s81, %s83
      %p87 = scmp.eq.s32.totalorder %s26, 0
      %p88 = por %p86, %p87
      %p89 = scmp.ne.s32.totalorder %s81, %s83
      %p90 = scmp.eq.s32.totalorder %s31, 3
      %p91 = por %p89, %p90
      %p92 = scmp.ne.s32.totalorder %s83, %s84
      %p93 = scmp.eq.s32.totalorder %s31, 0
      %p94 = por %p92, %p93
      %p95 = scmp.ne.s32.totalorder %s83, %s84
      %p96 = scmp.eq.s32.totalorder %s32, 3
      %p97 = por %p95, %p96
      %p99 = scmp.ne.s32.totalorder %s84, %s98
      %p100 = scmp.eq.s32.totalorder %s32, 0
      %p101 = por %p99, %p100
      %s102 = ssub.s32 %s26, %s33
      %p103 = scmp.eq.s32.totalorder %s102, 0
      %s105 = sadd.s32 %s104, 1
      %s106 = scalar_select %p103, %s104, %s105
      %p109 = pneg %p103
      %p110 = scmp.eq.s32.totalorder %s26, 3
      %p111 = por %p109, %p110
      %p112 = scmp.ne.s32.totalorder %s104, %s107
      %p113 = scmp.eq.s32.totalorder %s26, 0
      %p114 = por %p112, %p113
      %p115 = scmp.ne.s32.totalorder %s104, %s107
      %p116 = scmp.eq.s32.totalorder %s31, 3
      %p117 = por %p115, %p116
      %p118 = scmp.ne.s32.totalorder %s107, %s108
      %p119 = scmp.eq.s32.totalorder %s31, 0
      %p120 = por %p118, %p119
      %p121 = scmp.ne.s32.totalorder %s107, %s108
      %p122 = scmp.eq.s32.totalorder %s32, 3
      %p123 = por %p121, %p122
      %p125 = scmp.ne.s32.totalorder %s108, %s124
      %p126 = scmp.eq.s32.totalorder %s32, 0
      %p127 = por %p125, %p126
      %s129 = sadd.s32 %s128, 1
      %p132 = scmp.eq.s32.totalorder %s26, 3
      %p133 = scmp.ne.s32.totalorder %s128, %s130
      %p134 = scmp.eq.s32.totalorder %s26, 0
      %p135 = por %p133, %p134
      %p136 = scmp.ne.s32.totalorder %s128, %s130
      %p137 = scmp.eq.s32.totalorder %s31, 3
      %p138 = por %p136, %p137
      %p139 = scmp.ne.s32.totalorder %s130, %s131
      %p140 = scmp.eq.s32.totalorder %s31, 0
      %p141 = por %p139, %p140
      %p142 = scmp.ne.s32.totalorder %s130, %s131
      %p143 = scmp.eq.s32.totalorder %s32, 3
      %p144 = por %p142, %p143
      %p146 = scmp.ne.s32.totalorder %s131, %s145
      %p147 = scmp.eq.s32.totalorder %s32, 0
      %p148 = por %p146, %p147
      %s149 = ssub.s32 %s26, %s33
      %p150 = scmp.eq.s32.totalorder %s149, 0
      %s152 = sadd.s32 %s151, 1
      %s153 = scalar_select %p150, %s151, %s152
      %p156 = pneg %p150
      %p157 = scmp.eq.s32.totalorder %s26, 3
      %p158 = por %p156, %p157
      %p159 = scmp.ne.s32.totalorder %s151, %s154
      %p160 = scmp.eq.s32.totalorder %s26, 0
      %p161 = por %p159, %p160
      %p162 = scmp.ne.s32.totalorder %s151, %s154
      %p163 = scmp.eq.s32.totalorder %s31, 3
      %p164 = por %p162, %p163
      %p165 = scmp.ne.s32.totalorder %s154, %s155
      %p166 = scmp.eq.s32.totalorder %s31, 0
      %p167 = por %p165, %p166
      %p168 = scmp.ne.s32.totalorder %s154, %s155
      %p169 = scmp.eq.s32.totalorder %s32, 3
      %p170 = por %p168, %p169
      %p172 = scmp.ne.s32.totalorder %s155, %s171
      %p173 = scmp.eq.s32.totalorder %s32, 0
      %p174 = por %p172, %p173
      %p175 = scmp.le.s32.totalorder 1, %s26
      %p176 = scmp.lt.s32.totalorder %s26, 5
      %p177 = pnand %p175, %p176
      %p178 = pneg %p177
      // Predicated region
      $region9: #{tpu_custom_call.1} parent=5 // pred_check
        _
      $region10: #{tpu_custom_call.1} parent=5 // pred_check_branch
        %180 = sbr.rel (%p177) target = $region12
      $region11: #{tpu_custom_call.1} parent=5 // pred_region
        %s181 = ssub.s32 %s26, 1
        // Predicated region
        $region13: #{tpu_custom_call.1} parent=11 // pred_check
          %p182 = pneg %p47
        $region14: #{tpu_custom_call.1} parent=11 // pred_check_branch
          %184 = sbr.rel (%p182) target = $region16
        $region15: #{tpu_custom_call.1} parent=11 // pred_region
          _
        $region16: #{tpu_custom_call.1} parent=11 // pred_fallthru
          _
        // Predicated region
        $region17: #{tpu_custom_call.1} parent=11 // pred_check
          %p185 = pneg %p94
        $region18: #{tpu_custom_call.1} parent=11 // pred_check_branch
          %187 = sbr.rel (%p185) target = $region20
        $region19: #{tpu_custom_call.1} parent=11 // pred_region
          _
        $region20: #{tpu_custom_call.1} parent=11 // pred_fallthru
          _
        // Predicated region
        $region21: #{tpu_custom_call.1} parent=11 // pred_check
          %p188 = pneg %p141
        $region22: #{tpu_custom_call.1} parent=11 // pred_check_branch
          %190 = sbr.rel (%p188) target = $region24
        $region23: #{tpu_custom_call.1} parent=11 // pred_region
          _
        $region24: #{tpu_custom_call.1} parent=11 // pred_fallthru
          _
      $region12: #{tpu_custom_call.1} parent=5 // pred_fallthru
        _
      %p191 = scmp.lt.s32.totalorder %s26, 4
      // Predicated region
      $region25: #{tpu_custom_call.1} parent=5 // pred_check
        %p192 = pneg %p191
      $region26: #{tpu_custom_call.1} parent=5 // pred_check_branch
        %194 = sbr.rel (%p192) target = $region28
      $region27: #{tpu_custom_call.1} parent=5 // pred_region
        // Predicated region
        $region29: #{tpu_custom_call.1} parent=27 // pred_check
          %p195 = pneg %p67
        $region30: #{tpu_custom_call.1} parent=27 // pred_check_branch
          %197 = sbr.rel (%p195) target = $region32
        $region31: #{tpu_custom_call.1} parent=27 // pred_region
          %s198 = sand.u32 %s57, 1
          %s199 = scalar_lea.sflag [#allocation5], %s198
          %s200 = sand.u32 %s57, 1
          %s201 = smul.addr %s200, 32
          %s202 = scalar_lea.vmem [#allocation4], %s201
          %204 = vsyncadd %s199, 0
          %s205 = smul.addr %s26, 4
          %s206 = scalar_lea.hbm %s2, %s205
          %s207 = sshll.u32 %s206, 4
          %s208 = int_to_ptr.hbm [resolvable:$true] %s207
          %s209 = sshll.u32 %s202, 4
          %s210 = int_to_ptr.vmem [resolvable:$true] %s209
          %215 = dma.hbm_to_vmem [thread:$0]  %s208, 512, %s210, %s199, 256, 64, 4
        $region32: #{tpu_custom_call.1} parent=27 // pred_fallthru
          _
        // Predicated region
        $region33: #{tpu_custom_call.1} parent=27 // pred_check
          %p216 = pneg %p114
        $region34: #{tpu_custom_call.1} parent=27 // pred_check_branch
          %218 = sbr.rel (%p216) target = $region36
        $region35: #{tpu_custom_call.1} parent=27 // pred_region
          %p219 = scmp.lt.s32.totalorder %s26, 3
          %s220 = scalar_select %p219, %s26, 3
          %s221 = scalar_lea.vmem %s4, %s220
        $region36: #{tpu_custom_call.1} parent=27 // pred_fallthru
          _
      $region28: #{tpu_custom_call.1} parent=5 // pred_fallthru
        _
      %p222 = scmp.le.s32.totalorder 1, %s26
      %p223 = scmp.lt.s32.totalorder %s26, 5
      %p224 = pnand %p222, %p223
      %p225 = pneg %p224
      // Predicated region
      $region37: #{tpu_custom_call.1} parent=5 // pred_check
        _
      $region38: #{tpu_custom_call.1} parent=5 // pred_check_branch
        %227 = sbr.rel (%p224) target = $region40
      $region39: #{tpu_custom_call.1} parent=5 // pred_region
        %s228 = ssub.s32 %s26, 1
        %s229 = sand.u32 %s60, 1
        %s230 = scalar_lea.sflag [#allocation5], %s229
        %s231 = sand.u32 %s60, 1
        %s232 = smul.addr %s231, 32
        %s233 = scalar_lea.vmem [#allocation4], %s232
        // Predicated region
        $region41: #{tpu_custom_call.1} parent=39 // pred_check
          %p234 = pneg %p73
        $region42: #{tpu_custom_call.1} parent=39 // pred_check_branch
          %236 = sbr.rel (%p234) target = $region44
        $region43: #{tpu_custom_call.1} parent=39 // pred_region
          %238 = dma.done %s230, 512
        $region44: #{tpu_custom_call.1} parent=39 // pred_fallthru
          _
        %p239 = pneg %p47
        %p240 = pneg %p44
        %s241 = sand.u32 %s60, 1
        %s242 = scalar_lea.sflag [#allocation5], %s241
        %s243 = sand.u32 %s60, 1
        %s244 = smul.addr %s243, 32
        %s245 = scalar_lea.vmem [#allocation4], %s244
        %p246 = pneg %p73
        %p247 = pneg %p70
        %p248 = pneg %p94
        %p249 = pneg %p91
        %p250 = scmp.lt.s32.totalorder %s31, 3
        %s251 = scalar_select %p250, %s31, 3
        %s252 = scalar_lea.vmem %s4, %s251
        %p253 = pneg %p120
        %p254 = pneg %p117
        %p255 = pneg %p141
        %p256 = pneg %p138
        %p257 = pneg %p167
        %p258 = pneg %p164
        %s259 = sand.u32 %s154, 1
        %s260 = scalar_lea.sflag [#allocation6], %s259
        %s261 = sand.u32 %s154, 1
        %s262 = smul.addr %s261, 32
        %s263 = scalar_lea.vmem [#allocation7], %s262
        %p264 = scmp.lt.s32.totalorder %s31, 3
        %s265 = scalar_select %p264, %s31, 3
        %s266 = scalar_lea.vmem %s4, %s265
        %v268 = vld [vmem:[%s1] sm:$0xf]
        %v269 = vld [vmem:[%s1 + $0x4] sm:$0xf]
        %v270 = vld [vmem:[%s1 + $0x8] sm:$0xf]
        %v271 = vld [vmem:[%s1 + $0xc] sm:$0xf]
        %v272 = vld [vmem:[%s233] sm:$0xf]
        %v273 = vld [vmem:[%s233 + $0x4] sm:$0xf]
        %v274 = vld [vmem:[%s233 + $0x8] sm:$0xf]
        %v275 = vld [vmem:[%s233 + $0xc] sm:$0xf]
        %v276 = vld [vmem:[%s233 + $0x10] sm:$0xf]
        %v277 = vld [vmem:[%s233 + $0x14] sm:$0xf]
        %v278 = vld [vmem:[%s233 + $0x18] sm:$0xf]
        %v279 = vld [vmem:[%s233 + $0x1c] sm:$0xf]
        %v284 = vunpack.c.l.b16 %v268
        %v285 = vunpack.c.l.b16 %v269
        %v286 = vunpack.c.l.b16 %v270
        %v287 = vunpack.c.l.b16 %v271
        %v288 = vpack.c.b16 %v285, %v284
        %v289 = vpack.c.b16 %v287, %v286
        %v298 = vunpack.c.l.b16 %v272
        %v299 = vunpack.c.l.b16 %v273
        %v300 = vunpack.c.l.b16 %v274
        %v301 = vunpack.c.l.b16 %v275
        %v302 = vunpack.c.l.b16 %v276
        %v303 = vunpack.c.l.b16 %v277
        %v304 = vunpack.c.l.b16 %v278
        %v305 = vunpack.c.l.b16 %v279
        %v306 = vpack.c.b16 %v299, %v298
        %v307 = vpack.c.b16 %v301, %v300
        %v308 = vpack.c.b16 %v303, %v302
        %v309 = vpack.c.b16 %v305, %v304
        %vm314 = vcmask 523264
        %v316 = vsel %vm314, %v288, 0
        %v319 = vsel %vm314, %v289, 0
        %321 = vmatpush.bf16.msra.mxu0 0
        %322 = vmatpush.bf16.msra.mxu0 0
        %323 = vmatpush.bf16.msra.mxu0 0
        %324 = vmatpush.bf16.msra.mxu0 0
        %325 = vmatpush.bf16.msra.mxu0 %v309
        %326 = vmatpush.bf16.msra.mxu0 %v308
        %327 = vmatpush.bf16.msra.mxu0 %v307
        %328 = vmatpush.bf16.msra.mxu0 %v306
        %329 = vmatmul.bf16.gmra.mxu0 %v316
        %v330 = vpop.f32.mrf.mxu0
        %v331 = vadd.f32 0.0, %v330
        %v332 = vpop.f32.mrf.mxu0
        %v333 = vadd.f32 0.0, %v332
        %334 = vmatmul.bf16.gmra.mxu0 %v319
        %v335 = vpop.f32.mrf.mxu0
        %v336 = vadd.f32 0.0, %v335
        %v337 = vpop.f32.mrf.mxu0
        %v338 = vadd.f32 0.0, %v337
        %339 = vdwg.mxu0
        %v340 = vld [vmem:[%s3] sm:$0xff]
        %v341 = vld [vmem:[%s3 + $0x8] sm:$0xff]
        %v342 = vld [vmem:[%s3 + $0x10] sm:$0xff]
        %v343 = vld [vmem:[%s3 + $0x18] sm:$0xff]
        %345 = vset.pattern.permute.xlu0 0
        %346 = vperm.xlu0 %345, %v340
        %v347 = vpop.permute.xlu0 %346
        %350 = vset.pattern.permute.xlu0 0
        %351 = vperm.xlu0 %350, %v341
        %v352 = vpop.permute.xlu0 %351
        %355 = vset.pattern.permute.xlu0 0
        %356 = vperm.xlu0 %355, %v342
        %v357 = vpop.permute.xlu0 %356
        %360 = vset.pattern.permute.xlu0 0
        %361 = vperm.xlu0 %360, %v343
        %v362 = vpop.permute.xlu0 %361
        %v364 = vmul.f32 %v331, %v347
        %v365 = vmul.f32 %v333, %v352
        %v366 = vmul.f32 %v336, %v357
        %v367 = vmul.f32 %v338, %v362
        %v368 = vld [vmem:[%s266] sm:$0x1]
        %v370 = vperm.slane %v368, 0
        %v372 = vmul.f32 %v364, %v370
        %v373 = vmul.f32 %v365, %v370
        %v374 = vmul.f32 %v366, %v370
        %v375 = vmul.f32 %v367, %v370
        %s376 = sld [smem:[#allocation3 + %s31]]
        %p377 = scmp.ne.s32.totalorder %s376, 0
        // Predicated region
        $region45: #{tpu_custom_call.1} parent=39 // pred_check
          %p378 = pneg %p377
        $region46: #{tpu_custom_call.1} parent=39 // pred_check_branch
          %380 = sbr.rel (%p378) target = $region48
        $region47: #{tpu_custom_call.1} parent=39 // pred_region
          %s381 = smul.u32 %s31, 128
          %v382 = vlaneseq
          %v383 = vand.u32 %v382, 127
          %v384 = vstv %s381
          %v385 = vadd.s32 %v384, %v383
          %v386 = vld [vmem:[%s5] sm:$0xff]
          %v387 = vld [vmem:[%s5 + $0x8] sm:$0xff]
          %v388 = vld [vmem:[%s5 + $0x10] sm:$0xff]
          %v389 = vld [vmem:[%s5 + $0x18] sm:$0xff]
          %390 = vset.pattern.permute.xlu0 0
          %391 = vperm.xlu0 %390, %v386
          %v392 = vpop.permute.xlu0 %391
          %393 = vset.pattern.permute.xlu0 0
          %394 = vperm.xlu0 %393, %v387
          %v395 = vpop.permute.xlu0 %394
          %396 = vset.pattern.permute.xlu0 0
          %397 = vperm.xlu0 %396, %v388
          %v398 = vpop.permute.xlu0 %397
          %399 = vset.pattern.permute.xlu0 0
          %400 = vperm.xlu0 %399, %v389
          %v401 = vpop.permute.xlu0 %400
          %vm402 = vcmp.eq.s32.totalorder %v385, %v392
          %vm403 = vcmp.eq.s32.totalorder %v385, %v395
          %vm404 = vcmp.eq.s32.totalorder %v385, %v398
          %vm405 = vcmp.eq.s32.totalorder %v385, %v401
          %v406 = vsub.f32 %v372, 22.4
          %v407 = vsub.f32 %v373, 22.4
          %v408 = vsub.f32 %v374, 22.4
          %v409 = vsub.f32 %v375, 22.4
          %v410 = vsel %vm402, %v406, %v372
          %v411 = vsel %vm403, %v407, %v373
          %v412 = vsel %vm404, %v408, %v374
          %v413 = vsel %vm405, %v409, %v375
          %414 = vst [vmem:[%s263] sm:$0xff] %v410
          %415 = vst [vmem:[%s263 + $0x8] sm:$0xff] %v411
          %416 = vst [vmem:[%s263 + $0x10] sm:$0xff] %v412
          %417 = vst [vmem:[%s263 + $0x18] sm:$0xff] %v413
        $region48: #{tpu_custom_call.1} parent=39 // pred_fallthru
          _
        %s418 = sld [smem:[#allocation3 + %s31]]
        %p419 = scmp.eq.s32.totalorder %s418, 0
        // Predicated region
        $region49: #{tpu_custom_call.1} parent=39 // pred_check
          %p420 = pneg %p419
        $region50: #{tpu_custom_call.1} parent=39 // pred_check_branch
          %422 = sbr.rel (%p420) target = $region52
        $region51: #{tpu_custom_call.1} parent=39 // pred_region
          %423 = vst [vmem:[%s263] sm:$0xff] %v372
          %424 = vst [vmem:[%s263 + $0x8] sm:$0xff] %v373
          %425 = vst [vmem:[%s263 + $0x10] sm:$0xff] %v374
          %426 = vst [vmem:[%s263 + $0x18] sm:$0xff] %v375
        $region52: #{tpu_custom_call.1} parent=39 // pred_fallthru
          _
        %s427 = sand.u32 %s154, 1
        %s428 = scalar_lea.sflag [#allocation6], %s427
        %s429 = sand.u32 %s154, 1
        %s430 = smul.addr %s429, 32
        %s431 = scalar_lea.vmem [#allocation7], %s430
        // Predicated region
        $region53: #{tpu_custom_call.1} parent=39 // pred_check
          %p432 = pneg %p164
        $region54: #{tpu_custom_call.1} parent=39 // pred_check_branch
          %434 = sbr.rel (%p432) target = $region56
        $region55: #{tpu_custom_call.1} parent=39 // pred_region
          %436 = vsyncadd %s428, 0
          %s437 = smul.addr %s31, 8
          %s438 = scalar_lea.hbm %s6, %s437
          %s439 = sshll.u32 %s431, 4
          %s440 = int_to_ptr.vmem [resolvable:$true] %s439
          %s441 = sshll.u32 %s438, 4
          %s442 = int_to_ptr.hbm [resolvable:$true] %s441
          %447 = dma.vmem_to_hbm [thread:$0]  %s440, 512, %s442, %s428, 128, 512, 8
        $region56: #{tpu_custom_call.1} parent=39 // pred_fallthru
          _
      $region40: #{tpu_custom_call.1} parent=5 // pred_fallthru
        _
      %p448 = scmp.le.s32.totalorder 2, %s26
      // Predicated region
      $region57: #{tpu_custom_call.1} parent=5 // pred_check
        %p449 = pneg %p448
      $region58: #{tpu_custom_call.1} parent=5 // pred_check_branch
        %451 = sbr.rel (%p449) target = $region60
      $region59: #{tpu_custom_call.1} parent=5 // pred_region
        %s452 = ssub.s32 %s26, 2
        // Predicated region
        $region61: #{tpu_custom_call.1} parent=59 // pred_check
          %p453 = pneg %p170
        $region62: #{tpu_custom_call.1} parent=59 // pred_check_branch
          %455 = sbr.rel (%p453) target = $region64
        $region63: #{tpu_custom_call.1} parent=59 // pred_region
          %s456 = sand.u32 %s155, 1
          %s457 = scalar_lea.sflag [#allocation6], %s456
          %s458 = sand.u32 %s155, 1
          %s459 = smul.addr %s458, 32
          %s460 = scalar_lea.vmem [#allocation7], %s459
          %462 = dma.done %s457, 512
        $region64: #{tpu_custom_call.1} parent=59 // pred_fallthru
          _
      $region60: #{tpu_custom_call.1} parent=5 // pred_fallthru
        _
    $region6: #{tpu_custom_call.1} parent=1 // loop_footer
      %s30 = sadd.s32 1, %s26
    $region7: #{tpu_custom_call.1} parent=1 // loop_footer_branch
      %25 = sbr.rel target = $region3
    $region8: #{tpu_custom_call.1} parent=1 // loop_exit
      _
    %463 = vsyncpa [#allocation5], 1
    %s464 = scalar_lea.sflag [#allocation5], 1
    %465 = vsyncpa %s464, 1
    %466 = vsyncpa [#allocation6], 1
    %s467 = scalar_lea.sflag [#allocation6], 1
    %468 = vsyncpa %s467, 1

</llo_original>
